<compile_context>
chip_gen: v6e
topology: v6e:2x2x1
jax: 0.10.0
libtpu: 0.0.40
codegen_flags: <defaults>
</compile_context>

<pallas_src>
import functools

import jax
import jax.numpy as jnp
from jax.experimental import pallas as pl
from jax.experimental.pallas import tpu as pltpu


def _round_up(v, m):
    return (v + m - 1) // m * m


def _choose_l_tile(C, L, padding, itemsize, target_bytes=2 << 20):
    """Lane-dense (multiple-of-128) L tile that divides L, holds the causal halo,
    and keeps each (C, tile) buffer around `target_bytes`."""
    if L % 128 != 0:
        return L  # tiny / ragged sequence: single full-extent block
    target = max(128, (target_bytes // max(C * itemsize, 1)) // 128 * 128)
    cands = [t for t in range(128, L + 1, 128) if L % t == 0 and t >= padding]
    if not cands:
        return L
    small = [t for t in cands if t <= target]
    return max(small) if small else min(cands)


def _temporal_block_kernel(*refs, kernel_size, dilation, padding, halo_pad, has_halo):
    # refs = (x_ref, p_ref, [halo_ref], o_ref, xs_ref)
    if has_halo:
        x_ref, p_ref, halo_ref, o_ref, xs_ref = refs
    else:
        x_ref, p_ref, o_ref, xs_ref = refs
        halo_ref = None

    C, TL = x_ref.shape[1], x_ref.shape[2]
    K = kernel_size

    cur = x_ref[0].astype(jnp.float32)  # (C, TL): single load, reused for residual + tap K-1

    if K > 1:
        # Haloed copy of the tile in VMEM scratch:
        #   xs[:, halo_pad - padding : halo_pad] = previous samples (zeros at t<0)
        #   xs[:, halo_pad:]                     = current tile (128-aligned store)
        xs_ref[:, halo_pad:] = x_ref[0]
        if has_halo:
            xs_ref[:, halo_pad - padding:halo_pad] = halo_ref[0, 0]

    params = p_ref[...].astype(jnp.float32)  # (C, K+2): load once, then slice values
    w = params[:, :K]            # depthwise conv weights
    b = params[:, K:K + 1]       # conv bias
    a = params[:, K + 1:K + 2]   # PReLU per-channel slope

    # Causal depthwise conv as K shifted multiply-accumulates (f32 accumulation).
    acc = cur * w[:, K - 1:K]    # zero-shift tap: reuse the already-loaded tile
    for k in range(K - 1):
        start = halo_pad - padding + k * dilation  # static offset
        xk = xs_ref[:, pl.ds(start, TL)].astype(jnp.float32)
        acc = acc + xk * w[:, k:k + 1]

    y = acc + b + cur                       # conv bias + residual add
    out = jnp.where(y > 0.0, y, a * y)      # PReLU
    o_ref[0] = out.astype(o_ref.dtype)


def temporal_block(x, weight, bias, prelu_a, *, kernel_size, stride, dilation,
                   padding, l_tile=None):
    """Pallas implementation of TemporalBlock.forward.

    x:        (N, C, L) float32
    weight:   (C, 1, K) depthwise Conv1d weight (groups = C)
    bias:     (C,)      Conv1d bias
    prelu_a:  (C,)      PReLU per-channel parameter
    """
    assert stride == 1, "TemporalBlock is only used with stride=1"
    assert padding == dilation * (kernel_size - 1), (
        "residual add in TemporalBlock requires padding == dilation*(kernel_size-1)")

    N, C, L = x.shape
    K = kernel_size

    # Pack the tiny per-channel parameters into one constant-index input.
    params = jnp.concatenate(
        [weight.reshape(C, K), bias.reshape(C, 1), prelu_a.reshape(C, 1)],
        axis=1).astype(jnp.float32)                         # (C, K+2)

    TL = _choose_l_tile(C, L, padding, x.dtype.itemsize) if l_tile is None else l_tile
    assert L % TL == 0 and (TL == L or TL % 128 == 0)
    num_tiles = L // TL
    assert num_tiles == 1 or TL >= padding, "halo must fit in one previous tile"

    has_halo = padding > 0
    halo_pad = _round_up(padding, 128) if has_halo else 0   # lane-aligned tile store

    inputs = [x, params]
    in_specs = [
        pl.BlockSpec((1, C, TL), lambda n, lt: (n, 0, lt)),
        pl.BlockSpec((C, K + 2), lambda n, lt: (0, 0)),
    ]
    if has_halo:
        # halos[n, lt] = x[n, :, lt*TL - padding : lt*TL], zeros for lt == 0 (causal
        # boundary).  Only `padding` lanes per tile -> negligible extra HBM traffic.
        if num_tiles > 1:
            xr = x.reshape(N, C, num_tiles, TL)
            tails = xr[:, :, :num_tiles - 1, TL - padding:]          # (N, C, T-1, pad)
            halos = jnp.concatenate(
                [jnp.zeros((N, C, 1, padding), x.dtype), tails], axis=2)
            halos = jnp.transpose(halos, (0, 2, 1, 3))               # (N, T, C, pad)
        else:
            halos = jnp.zeros((N, 1, C, padding), x.dtype)
        inputs.append(halos)
        in_specs.append(pl.BlockSpec((1, 1, C, padding), lambda n, lt: (n, lt, 0, 0)))

    kernel = functools.partial(
        _temporal_block_kernel, kernel_size=K, dilation=dilation,
        padding=padding, halo_pad=halo_pad, has_halo=has_halo)

    out = pl.pallas_call(
        kernel,
        out_shape=jax.ShapeDtypeStruct((N, C, L), x.dtype),
        grid_spec=pltpu.PrefetchScalarGridSpec(
            num_scalar_prefetch=0,
            grid=(N, num_tiles),
            in_specs=in_specs,
            out_specs=pl.BlockSpec((1, C, TL), lambda n, lt: (n, 0, lt)),
            scratch_shapes=[pltpu.VMEM((C, TL + halo_pad), x.dtype)],
        ),
        compiler_params=pltpu.CompilerParams(
            dimension_semantics=("parallel", "parallel"),
            vmem_limit_bytes=32 * 1024 * 1024),
    )(*inputs)
    return out


def _reference(x, weight, bias, prelu_a, *, kernel_size, dilation, padding):
    """Pure-JAX reference of the same forward pass (for verification)."""
    N, C, L = x.shape
    xp = jnp.pad(x, ((0, 0), (0, 0), (padding, 0)))
    w = weight.reshape(C, kernel_size)
    acc = jnp.zeros((N, C, L), jnp.float32)
    for k in range(kernel_size):
        acc = acc + xp[:, :, k * dilation:k * dilation + L] * w[None, :, k:k + 1]
    acc = acc + bias[None, :, None]
    y = acc + x
    a = prelu_a[None, :, None]
    return jnp.where(y > 0, y, a * y)


def _make_params(key, C, K):
    k_w, k_b = jax.random.split(key)
    # conv1.weight ~ N(0, 0.1), shape (n_outputs, n_inputs/groups, K) = (C, 1, K)
    weight = 0.1 * jax.random.normal(k_w, (C, 1, K), dtype=jnp.float32)
    # conv1.bias default init: U(-1/sqrt(fan_in), 1/sqrt(fan_in)), fan_in = 1*K
    bound = 1.0 / jnp.sqrt(jnp.float32(K))
    bias = jax.random.uniform(k_b, (C,), dtype=jnp.float32, minval=-bound, maxval=bound)
    # PReLU(n_inputs) default init: 0.25 per channel
    prelu_a = jnp.full((C,), 0.25, dtype=jnp.float32)
    return weight, bias, prelu_a


if __name__ == "__main__":
    key = jax.random.PRNGKey(0)
    k1, k2, k3, k4 = jax.random.split(key, 4)

    # --- Case 1: module-default small shapes (single L tile) ---
    N, C, L, K, dil = 2, 4, 16, 3, 2
    pad = dil * (K - 1)
    x = jax.random.normal(k1, (N, C, L), dtype=jnp.float32)
    weight, bias, prelu_a = _make_params(k2, C, K)

    out = temporal_block(x, weight, bias, prelu_a,
                         kernel_size=K, stride=1, dilation=dil, padding=pad)
    out = jax.block_until_ready(out)
    ref = _reference(x, weight, bias, prelu_a,
                     kernel_size=K, dilation=dil, padding=pad)
    assert out.shape == (N, C, L)
    assert jnp.allclose(out, ref, atol=1e-5, rtol=1e-5)

    # --- Case 2: force the tiled / halo path (multiple lane-dense L tiles) ---
    N2, C2, L2, K2, dil2 = 2, 8, 512, 3, 4
    pad2 = dil2 * (K2 - 1)
    x2 = jax.random.normal(k3, (N2, C2, L2), dtype=jnp.float32)
    w2, b2, a2 = _make_params(k4, C2, K2)

    out2 = temporal_block(x2, w2, b2, a2, kernel_size=K2, stride=1,
                          dilation=dil2, padding=pad2, l_tile=128)
    out2 = jax.block_until_ready(out2)
    ref2 = _reference(x2, w2, b2, a2, kernel_size=K2, dilation=dil2, padding=pad2)
    assert out2.shape == (N2, C2, L2)
    assert jnp.allclose(out2, ref2, atol=1e-5, rtol=1e-5)

    print("KERNEL_OK")
</pallas_src>

<mosaic_0001>
module attributes {stable_mosaic.version = 11 : i64} {
  func.func @_temporal_block_kernel(%arg0: i32, %arg1: i32, %arg2: memref<1x4x16xf32, #tpu.memory_space<vmem>>, %arg3: memref<4x5xf32, #tpu.memory_space<vmem>>, %arg4: memref<1x1x4x4xf32, #tpu.memory_space<vmem>>, %arg5: memref<1x4x16xf32, #tpu.memory_space<vmem>>, %arg6: memref<4x144xf32, #tpu.memory_space<vmem>>) attributes {dimension_semantics = [#tpu.dimension_semantics<parallel>, #tpu.dimension_semantics<parallel>], iteration_bounds = array<i64: 2, 1>, scalar_prefetch = 0 : i64, scratch_operands = 1 : i64, tpu.core_type = #tpu.core_type<tc>, window_params = [{transform_indices = @transform_0, window_bounds = array<i64: 1, 4, 16>}, {pipeline_mode = #tpu.pipeline_mode<synchronous>, transform_indices = @transform_1, window_bounds = array<i64: 4, 5>}, {transform_indices = @transform_2, window_bounds = array<i64: 1, 1, 4, 4>}, {transform_indices = @transform_3, window_bounds = array<i64: 1, 4, 16>}]} {
    %c0 = arith.constant 0 : index
    %c0_0 = arith.constant 0 : index
    %c0_1 = arith.constant 0 : index
    %0 = vector.load %arg2[%c0, %c0_0, %c0_1] : memref<1x4x16xf32, #tpu.memory_space<vmem>>, vector<1x4x16xf32>
    %1 = vector.shape_cast %0 : vector<1x4x16xf32> to vector<4x16xf32>
    %c0_2 = arith.constant 0 : index
    %c0_3 = arith.constant 0 : index
    %c0_4 = arith.constant 0 : index
    %2 = vector.load %arg2[%c0_2, %c0_3, %c0_4] : memref<1x4x16xf32, #tpu.memory_space<vmem>>, vector<1x4x16xf32>
    %3 = vector.shape_cast %2 : vector<1x4x16xf32> to vector<4x16xf32>
    %c0_5 = arith.constant 0 : index
    %c128 = arith.constant 128 : index
    %4 = vector.load %arg6[%c0_5, %c128] : memref<4x144xf32, #tpu.memory_space<vmem>>, vector<4x16xf32>
    tpu.vector_store %arg6[%c0_5, %c128], %3 {strides = array<i32>} : memref<4x144xf32, #tpu.memory_space<vmem>>, vector<4x16xf32>,
    %c0_6 = arith.constant 0 : index
    %c0_7 = arith.constant 0 : index
    %c0_8 = arith.constant 0 : index
    %c0_9 = arith.constant 0 : index
    %5 = vector.load %arg4[%c0_6, %c0_7, %c0_8, %c0_9] : memref<1x1x4x4xf32, #tpu.memory_space<vmem>>, vector<1x1x4x4xf32>
    %6 = vector.shape_cast %5 : vector<1x1x4x4xf32> to vector<4x4xf32>
    %c0_10 = arith.constant 0 : index
    %c124 = arith.constant 124 : index
    %7 = vector.load %arg6[%c0_10, %c124] : memref<4x144xf32, #tpu.memory_space<vmem>>, vector<4x4xf32>
    tpu.vector_store %arg6[%c0_10, %c124], %6 {strides = array<i32>} : memref<4x144xf32, #tpu.memory_space<vmem>>, vector<4x4xf32>,
    %c0_11 = arith.constant 0 : index
    %c0_12 = arith.constant 0 : index
    %8 = vector.load %arg3[%c0_11, %c0_12] : memref<4x5xf32, #tpu.memory_space<vmem>>, vector<4x5xf32>
    %9 = vector.extract_strided_slice %8 {offsets = [0, 0], sizes = [4, 3], strides = [1, 1]} : vector<4x5xf32> to vector<4x3xf32>
    %10 = vector.extract_strided_slice %8 {offsets = [0, 3], sizes = [4, 1], strides = [1, 1]} : vector<4x5xf32> to vector<4x1xf32>
    %11 = vector.extract_strided_slice %8 {offsets = [0, 4], sizes = [4, 1], strides = [1, 1]} : vector<4x5xf32> to vector<4x1xf32>
    %12 = vector.extract_strided_slice %9 {offsets = [0, 2], sizes = [4, 1], strides = [1, 1]} : vector<4x3xf32> to vector<4x1xf32>
    %13 = vector.broadcast %12 : vector<4x1xf32> to vector<4x16xf32>
    %14 = arith.mulf %1, %13 : vector<4x16xf32>
    %c0_13 = arith.constant 0 : index
    %c124_14 = arith.constant 124 : index
    %15 = vector.load %arg6[%c0_13, %c124_14] : memref<4x144xf32, #tpu.memory_space<vmem>>, vector<4x16xf32>
    %16 = vector.extract_strided_slice %9 {offsets = [0, 0], sizes = [4, 1], strides = [1, 1]} : vector<4x3xf32> to vector<4x1xf32>
    %17 = vector.broadcast %16 : vector<4x1xf32> to vector<4x16xf32>
    %18 = arith.mulf %15, %17 : vector<4x16xf32>
    %19 = arith.addf %14, %18 : vector<4x16xf32>
    %c0_15 = arith.constant 0 : index
    %c126 = arith.constant 126 : index
    %20 = vector.load %arg6[%c0_15, %c126] : memref<4x144xf32, #tpu.memory_space<vmem>>, vector<4x16xf32>
    %21 = vector.extract_strided_slice %9 {offsets = [0, 1], sizes = [4, 1], strides = [1, 1]} : vector<4x3xf32> to vector<4x1xf32>
    %22 = vector.broadcast %21 : vector<4x1xf32> to vector<4x16xf32>
    %23 = arith.mulf %20, %22 : vector<4x16xf32>
    %24 = arith.addf %19, %23 : vector<4x16xf32>
    %25 = vector.broadcast %10 : vector<4x1xf32> to vector<4x16xf32>
    %26 = arith.addf %24, %25 : vector<4x16xf32>
    %27 = arith.addf %26, %1 : vector<4x16xf32>
    %cst = arith.constant 0.000000e+00 : f32
    %28 = vector.broadcast %cst : f32 to vector<4x16xf32>
    %29 = arith.cmpf ogt, %27, %28 : vector<4x16xf32>
    %30 = vector.broadcast %11 : vector<4x1xf32> to vector<4x16xf32>
    %31 = arith.mulf %30, %27 : vector<4x16xf32>
    %32 = arith.select %29, %27, %31 : vector<4x16xi1>, vector<4x16xf32>
    %c0_16 = arith.constant 0 : index
    %c0_17 = arith.constant 0 : index
    %c0_18 = arith.constant 0 : index
    %33 = vector.load %arg5[%c0_16, %c0_17, %c0_18] : memref<1x4x16xf32, #tpu.memory_space<vmem>>, vector<1x4x16xf32>
    %34 = vector.shape_cast %33 : vector<1x4x16xf32> to vector<4x16xf32>
    %35 = vector.shape_cast %32 : vector<4x16xf32> to vector<1x4x16xf32>
    tpu.vector_store %arg5[%c0_16, %c0_17, %c0_18], %35 {strides = array<i32>} : memref<1x4x16xf32, #tpu.memory_space<vmem>>, vector<1x4x16xf32>,
    return
  }
  func.func @transform_0(%arg0: i32, %arg1: i32) -> (i32, i32, i32) {
    %c0_i32 = arith.constant 0 : i32
    %c0_i32_0 = arith.constant 0 : i32
    return %arg0, %c0_i32, %arg1 : i32, i32, i32
  }
  func.func @transform_1(%arg0: i32, %arg1: i32) -> (i32, i32) {
    %c0_i32 = arith.constant 0 : i32
    %c0_i32_0 = arith.constant 0 : i32
    %c0_i32_1 = arith.constant 0 : i32
    return %c0_i32, %c0_i32_0 : i32, i32
  }
  func.func @transform_2(%arg0: i32, %arg1: i32) -> (i32, i32, i32, i32) {
    %c0_i32 = arith.constant 0 : i32
    %c0_i32_0 = arith.constant 0 : i32
    %c0_i32_1 = arith.constant 0 : i32
    return %arg0, %arg1, %c0_i32, %c0_i32_0 : i32, i32, i32, i32
  }
  func.func @transform_3(%arg0: i32, %arg1: i32) -> (i32, i32, i32) {
    %c0_i32 = arith.constant 0 : i32
    %c0_i32_0 = arith.constant 0 : i32
    return %arg0, %c0_i32, %arg1 : i32, i32, i32
  }
}

</mosaic_0001>

<llo_original>
// kernel: tpu_custom_call.1
$region0: #{tpu_custom_call.1}
  #allocation0 [shape = 'u32[]', space=smem, size = 0x4, offset = 0x4, fixed_abs, tag = 'smem constant byte address 0x4 - core index']
  #allocation1 [shape = 'u32[144,128]{1,0:T(1,128)}', space=vmem, size = 0x12000, scoped, tag = 'internal scratch']
  #allocation2 [shape = 'f32[4,144]{1,0:T(4,128)}', space=vmem, size = 0x1000, scoped, tag = 'scratch operand']
  %s0 = inlined_call_operand.hbm [shape: f32[2,4,16], index: 0, kind: input, shape index: {}]
  %s1 = inlined_call_operand.hbm [shape: f32[4,5], index: 1, kind: input, shape index: {}]
  %s2 = inlined_call_operand.hbm [shape: f32[2,1,4,4], index: 2, kind: input, shape index: {}]
  %s3 = inlined_call_operand.hbm [shape: f32[2,4,16], index: 3, kind: output, shape index: {}]
  %s4 = sld [smem:[#allocation0]]
  $region57: #{tpu_custom_call.1} parent=0
    _
  %s6 = ssub.s32 1, %s4
  %s7 = scalar_select 0, %s6, %s4
  $region1: #{tpu_custom_call.1} parent=0
    #allocation3 [shape = 'u8[4096]{0}', space=vmem, size = 0x1000, scoped, tag = 'input window, operand 0']
    #allocation4 [shape = 's32[2]{0}', space=sflag, size = 0x8, scoped, tag = 'scoped memory for tpu_custom_call.1']
    #allocation5 [shape = 's32[2]{0}', space=sflag, size = 0x8, scoped, tag = 'scoped memory for tpu_custom_call.1']
    #allocation6 [shape = 'u8[2048]{0}', space=vmem, size = 0x800, scoped, tag = 'input window, operand 1, single buffered']
    #allocation7 [shape = 's32[1]{0}', space=sflag, size = 0x4, scoped, tag = 'scoped memory for tpu_custom_call.1']
    #allocation8 [shape = 'u8[4096]{0}', space=vmem, size = 0x1000, scoped, tag = 'input window, operand 2']
    #allocation9 [shape = 'u8[4096]{0}', space=vmem, size = 0x1000, scoped, tag = 'output window, operand 0']
    %8 = vsyncpa [#allocation4], 0
    %s9 = scalar_lea.sflag [#allocation4], 1
    %10 = vsyncpa %s9, 0
    %11 = vsyncpa [#allocation7], 0
    %12 = vsyncpa [#allocation5], 0
    %s13 = scalar_lea.sflag [#allocation5], 1
    %14 = vsyncpa %s13, 0
    loop: start=0, step=1, limit=4
    $region2: #{tpu_custom_call.1} parent=1 // loop_pre_header
      _
    $region3: #{tpu_custom_call.1} parent=1 // loop_header
      %s16 = sphi 0, %s20
      %p17 = scmp.ge.s32.totalorder %s16, 4
      %s23 = sphi 0, %s35
      %s24 = sphi 0, %s31
      %s25 = sphi 0, %s23
      %s26 = sphi 0, %s24
      %s27 = sphi 0, %s25
      %s28 = sphi 0, %s26
      %s40 = sphi 0, %s42
      %s43 = sphi 0, %s40
      %s44 = sphi 0, %s43
      %s60 = sphi 0, %s44
      %s64 = sphi 0, %s64
      %s66 = sphi 0, %s64
      %s67 = sphi 0, %s66
      %s81 = sphi 0, %s67
      %s89 = sphi 0, %s91
      %s92 = sphi 0, %s89
      %s93 = sphi 0, %s92
      %s109 = sphi 0, %s93
      %s117 = sphi 0, %s119
      %s120 = sphi 0, %s117
      %s121 = sphi 0, %s120
      %s137 = sphi 0, %s121
    $region4: #{tpu_custom_call.1} parent=1 // loop_header_branch
      %19 = sbr.rel (%p17) target = $region8
    $region5: #{tpu_custom_call.1} parent=1 // loop_body
      %s21 = ssub.s32 %s16, 1
      %s22 = ssub.s32 %s16, 2
      %s29 = sadd.s32 1, %s24
      %p30 = scmp.ge.s32.totalorder %s29, 1
      %s31 = scalar_select %p30, 0, %s29
      %s32 = sadd.s32 1, %s23
      %s33 = scalar_select %p30, %s32, %s23
      %p34 = scmp.ge.s32.totalorder %s33, 2
      %s35 = scalar_select %p34, 0, %s33
      %s36 = ssub.s32 %s23, %s35
      %s37 = ssub.s32 %s24, %s31
      %s38 = sor.u32 %s36, %s37
      %p39 = scmp.eq.s32.totalorder %s38, 0
      %s41 = sadd.s32 %s40, 1
      %s42 = scalar_select %p39, %s40, %s41
      %p45 = pneg %p39
      %p46 = scmp.eq.s32.totalorder %s16, 1
      %p47 = por %p45, %p46
      %p48 = scmp.ne.s32.totalorder %s40, %s43
      %p49 = scmp.eq.s32.totalorder %s16, 0
      %p50 = por %p48, %p49
      %p51 = scmp.ne.s32.totalorder %s40, %s43
      %p52 = scmp.eq.s32.totalorder %s21, 1
      %p53 = por %p51, %p52
      %p54 = scmp.ne.s32.totalorder %s43, %s44
      %p55 = scmp.eq.s32.totalorder %s21, 0
      %p56 = por %p54, %p55
      %p57 = scmp.ne.s32.totalorder %s43, %s44
      %p58 = scmp.eq.s32.totalorder %s22, 1
      %p59 = por %p57, %p58
      %p61 = scmp.ne.s32.totalorder %s44, %s60
      %p62 = scmp.eq.s32.totalorder %s22, 0
      %p63 = por %p61, %p62
      %s65 = sadd.s32 %s64, 1
      %p68 = scmp.eq.s32.totalorder %s16, 1
      %p69 = scmp.ne.s32.totalorder %s64, %s66
      %p70 = scmp.eq.s32.totalorder %s16, 0
      %p71 = por %p69, %p70
      %p72 = scmp.ne.s32.totalorder %s64, %s66
      %p73 = scmp.eq.s32.totalorder %s21, 1
      %p74 = por %p72, %p73
      %p75 = scmp.ne.s32.totalorder %s66, %s67
      %p76 = scmp.eq.s32.totalorder %s21, 0
      %p77 = por %p75, %p76
      %p78 = scmp.ne.s32.totalorder %s66, %s67
      %p79 = scmp.eq.s32.totalorder %s22, 1
      %p80 = por %p78, %p79
      %p82 = scmp.ne.s32.totalorder %s67, %s81
      %p83 = scmp.eq.s32.totalorder %s22, 0
      %p84 = por %p82, %p83
      %s85 = ssub.s32 %s23, %s35
      %s86 = ssub.s32 %s24, %s31
      %s87 = sor.u32 %s85, %s86
      %p88 = scmp.eq.s32.totalorder %s87, 0
      %s90 = sadd.s32 %s89, 1
      %s91 = scalar_select %p88, %s89, %s90
      %p94 = pneg %p88
      %p95 = scmp.eq.s32.totalorder %s16, 1
      %p96 = por %p94, %p95
      %p97 = scmp.ne.s32.totalorder %s89, %s92
      %p98 = scmp.eq.s32.totalorder %s16, 0
      %p99 = por %p97, %p98
      %p100 = scmp.ne.s32.totalorder %s89, %s92
      %p101 = scmp.eq.s32.totalorder %s21, 1
      %p102 = por %p100, %p101
      %p103 = scmp.ne.s32.totalorder %s92, %s93
      %p104 = scmp.eq.s32.totalorder %s21, 0
      %p105 = por %p103, %p104
      %p106 = scmp.ne.s32.totalorder %s92, %s93
      %p107 = scmp.eq.s32.totalorder %s22, 1
      %p108 = por %p106, %p107
      %p110 = scmp.ne.s32.totalorder %s93, %s109
      %p111 = scmp.eq.s32.totalorder %s22, 0
      %p112 = por %p110, %p111
      %s113 = ssub.s32 %s23, %s35
      %s114 = ssub.s32 %s24, %s31
      %s115 = sor.u32 %s113, %s114
      %p116 = scmp.eq.s32.totalorder %s115, 0
      %s118 = sadd.s32 %s117, 1
      %s119 = scalar_select %p116, %s117, %s118
      %p122 = pneg %p116
      %p123 = scmp.eq.s32.totalorder %s16, 1
      %p124 = por %p122, %p123
      %p125 = scmp.ne.s32.totalorder %s117, %s120
      %p126 = scmp.eq.s32.totalorder %s16, 0
      %p127 = por %p125, %p126
      %p128 = scmp.ne.s32.totalorder %s117, %s120
      %p129 = scmp.eq.s32.totalorder %s21, 1
      %p130 = por %p128, %p129
      %p131 = scmp.ne.s32.totalorder %s120, %s121
      %p132 = scmp.eq.s32.totalorder %s21, 0
      %p133 = por %p131, %p132
      %p134 = scmp.ne.s32.totalorder %s120, %s121
      %p135 = scmp.eq.s32.totalorder %s22, 1
      %p136 = por %p134, %p135
      %p138 = scmp.ne.s32.totalorder %s121, %s137
      %p139 = scmp.eq.s32.totalorder %s22, 0
      %p140 = por %p138, %p139
      %p141 = scmp.le.s32.totalorder 1, %s16
      %p142 = scmp.lt.s32.totalorder %s16, 3
      %p143 = pnand %p141, %p142
      %p144 = pneg %p143
      // Predicated region
      $region9: #{tpu_custom_call.1} parent=5 // pred_check
        _
      $region10: #{tpu_custom_call.1} parent=5 // pred_check_branch
        %146 = sbr.rel (%p143) target = $region12
      $region11: #{tpu_custom_call.1} parent=5 // pred_region
        %s147 = ssub.s32 %s16, 1
        // Predicated region
        $region13: #{tpu_custom_call.1} parent=11 // pred_check
          %p148 = pneg %p77
        $region14: #{tpu_custom_call.1} parent=11 // pred_check_branch
          %150 = sbr.rel (%p148) target = $region16
        $region15: #{tpu_custom_call.1} parent=11 // pred_region
          %s152 = ssub.s32 64, 64
          %153 = vsyncadd [#allocation7], %s152
          %s155 = sshll.u32 [#allocation6], 4
          %s156 = int_to_ptr.vmem [resolvable:$true] %s155
          %158 = dma.hbm_to_vmem [thread:$0]  %s1, 64, %s156, [#allocation7]
        $region16: #{tpu_custom_call.1} parent=11 // pred_fallthru
          _
      $region12: #{tpu_custom_call.1} parent=5 // pred_fallthru
        _
      %p159 = scmp.lt.s32.totalorder %s16, 2
      // Predicated region
      $region17: #{tpu_custom_call.1} parent=5 // pred_check
        %p160 = pneg %p159
      $region18: #{tpu_custom_call.1} parent=5 // pred_check_branch
        %162 = sbr.rel (%p160) target = $region20
      $region19: #{tpu_custom_call.1} parent=5 // pred_region
        // Predicated region
        $region21: #{tpu_custom_call.1} parent=19 // pred_check
          %p163 = pneg %p50
        $region22: #{tpu_custom_call.1} parent=19 // pred_check_branch
          %165 = sbr.rel (%p163) target = $region24
        $region23: #{tpu_custom_call.1} parent=19 // pred_region
          %s166 = sand.u32 %s16, 1
          %s167 = scalar_lea.sflag [#allocation4], %s166
          %s168 = sand.u32 %s40, 1
          %s169 = smul.addr %s168, 4
          %s170 = scalar_lea.vmem [#allocation3], %s169
          %s172 = ssub.s32 64, 64
          %173 = vsyncadd %s167, %s172
          %s174 = sadd.s32 %s24, %s23
          %s175 = smul.addr %s174, 64
          %s176 = scalar_lea.hbm %s0, %s175
          %s178 = sshll.u32 %s170, 4
          %s179 = int_to_ptr.vmem [resolvable:$true] %s178
          %181 = dma.hbm_to_vmem [thread:$0]  %s176, 64, %s179, %s167
        $region24: #{tpu_custom_call.1} parent=19 // pred_fallthru
          _
        // Predicated region
        $region25: #{tpu_custom_call.1} parent=19 // pred_check
          %p182 = pneg %p99
        $region26: #{tpu_custom_call.1} parent=19 // pred_check_branch
          %184 = sbr.rel (%p182) target = $region28
        $region27: #{tpu_custom_call.1} parent=19 // pred_region
          %s185 = sand.u32 %s16, 1
          %s186 = scalar_lea.sflag [#allocation4], %s185
          %s187 = sand.u32 %s89, 1
          %s188 = smul.addr %s187, 4
          %s189 = scalar_lea.vmem [#allocation8], %s188
          %s191 = ssub.s32 64, 64
          %192 = vsyncadd %s186, %s191
          %s193 = sadd.s32 %s24, %s23
          %s194 = smul.addr %s193, 64
          %s195 = scalar_lea.hbm %s2, %s194
          %s197 = sshll.u32 %s189, 4
          %s198 = int_to_ptr.vmem [resolvable:$true] %s197
          %200 = dma.hbm_to_vmem [thread:$0]  %s195, 64, %s198, %s186
        $region28: #{tpu_custom_call.1} parent=19 // pred_fallthru
          _
      $region20: #{tpu_custom_call.1} parent=5 // pred_fallthru
        _
      %p201 = scmp.le.s32.totalorder 1, %s16
      %p202 = scmp.lt.s32.totalorder %s16, 3
      %p203 = pnand %p201, %p202
      %p204 = pneg %p203
      // Predicated region
      $region29: #{tpu_custom_call.1} parent=5 // pred_check
        _
      $region30: #{tpu_custom_call.1} parent=5 // pred_check_branch
        %206 = sbr.rel (%p203) target = $region32
      $region31: #{tpu_custom_call.1} parent=5 // pred_region
        %s207 = ssub.s32 %s16, 1
        %s208 = sand.u32 %s21, 1
        %s209 = scalar_lea.sflag [#allocation4], %s208
        %s210 = sand.u32 %s43, 1
        %s211 = smul.addr %s210, 4
        %s212 = scalar_lea.vmem [#allocation3], %s211
        // Predicated region
        $region33: #{tpu_custom_call.1} parent=31 // pred_check
          %p213 = pneg %p56
        $region34: #{tpu_custom_call.1} parent=31 // pred_check_branch
          %215 = sbr.rel (%p213) target = $region36
        $region35: #{tpu_custom_call.1} parent=31 // pred_region
          %216 = dma.done %s209, 64
        $region36: #{tpu_custom_call.1} parent=31 // pred_fallthru
          _
        // Predicated region
        $region37: #{tpu_custom_call.1} parent=31 // pred_check
          %p217 = pneg %p77
        $region38: #{tpu_custom_call.1} parent=31 // pred_check_branch
          %219 = sbr.rel (%p217) target = $region40
        $region39: #{tpu_custom_call.1} parent=31 // pred_region
          %220 = dma.done [#allocation7], 64
        $region40: #{tpu_custom_call.1} parent=31 // pred_fallthru
          _
        %s221 = sand.u32 %s21, 1
        %s222 = scalar_lea.sflag [#allocation4], %s221
        %s223 = sand.u32 %s92, 1
        %s224 = smul.addr %s223, 4
        %s225 = scalar_lea.vmem [#allocation8], %s224
        // Predicated region
        $region41: #{tpu_custom_call.1} parent=31 // pred_check
          %p226 = pneg %p105
        $region42: #{tpu_custom_call.1} parent=31 // pred_check_branch
          %228 = sbr.rel (%p226) target = $region44
        $region43: #{tpu_custom_call.1} parent=31 // pred_region
          %229 = dma.done %s222, 64
        $region44: #{tpu_custom_call.1} parent=31 // pred_fallthru
          _
        %s230 = sand.u32 %s21, 1
        %s231 = scalar_lea.sflag [#allocation4], %s230
        %s232 = sand.u32 %s43, 1
        %s233 = smul.addr %s232, 4
        %s234 = scalar_lea.vmem [#allocation3], %s233
        %p235 = pneg %p56
        %p236 = pneg %p53
        %p237 = pneg %p77
        %p238 = pneg %p74
        %s239 = sand.u32 %s21, 1
        %s240 = scalar_lea.sflag [#allocation4], %s239
        %s241 = sand.u32 %s92, 1
        %s242 = smul.addr %s241, 4
        %s243 = scalar_lea.vmem [#allocation8], %s242
        %p244 = pneg %p105
        %p245 = pneg %p102
        %p246 = pneg %p133
        %p247 = pneg %p130
        %s248 = sand.u32 %s120, 1
        %s249 = scalar_lea.sflag [#allocation5], %s248
        %s250 = sand.u32 %s120, 1
        %s251 = smul.addr %s250, 4
        %s252 = scalar_lea.vmem [#allocation9], %s251
        %v253 = vld [vmem:[%s212] sm:$0xf]
        %vm254 = vcmask 125952
        %255 = vst.msk [vmem:[#allocation2 + $0x4] sm:$0xf] %vm254, %v253
        %v256 = vld [vmem:[%s225] sm:$0xf]
        %258 = vrot.lane.b32.xlu0 %v256, 124
        %v259 = vpop.permute.xlu0 %258
        %vm261 = vcmask 1044448
        %262 = vst.msk [vmem:[#allocation2] sm:$0xf] %vm261, %v259
        %v263 = vld [vmem:[#allocation6] sm:$0xf]
        %265 = vset.pattern.permute.xlu0 2
        %266 = vperm.xlu0 %265, %v263
        %v267 = vpop.permute.xlu0 %266
        %v269 = vmul.f32 %v253, %v267
        %v270 = vld [vmem:[#allocation2] sm:$0xff]
        %271 = vset.pattern.permute.xlu0 0
        %272 = vperm.xlu0 %271, %v263
        %v273 = vpop.permute.xlu0 %272
        %v275 = vmul.f32 %v270, %v273
        %v277 = vcombine.high %v275, %v275
        %278 = vrot.lane.b32.xlu0 %v275, 4
        %v279 = vpop.permute.xlu0 %278
        %280 = vrot.lane.b32.xlu0 %v277, 4
        %v281 = vpop.permute.xlu0 %280
        %vm282 = vcmask 31744
        %v283 = vsel %vm282, %v279, %v281
        %v285 = vadd.f32 %v269, %v283
        %v286 = vld [vmem:[#allocation2] sm:$0xff]
        %287 = vset.pattern.permute.xlu0 1
        %288 = vperm.xlu0 %287, %v263
        %v289 = vpop.permute.xlu0 %288
        %v291 = vmul.f32 %v286, %v289
        %v293 = vcombine.high %v291, %v291
        %294 = vrot.lane.b32.xlu0 %v291, 2
        %v295 = vpop.permute.xlu0 %294
        %296 = vrot.lane.b32.xlu0 %v293, 2
        %v297 = vpop.permute.xlu0 %296
        %vm298 = vcmask 15360
        %v299 = vsel %vm298, %v295, %v297
        %v301 = vadd.f32 %v285, %v299
        %302 = vset.pattern.permute.xlu0 3
        %303 = vperm.xlu0 %302, %v263
        %v304 = vpop.permute.xlu0 %303
        %v306 = vadd.f32 %v301, %v304
        %v307 = vadd.f32 %v306, %v253
        %vm308 = vcmp.gt.f32.partialorder %v307, 0.0
        %309 = vset.pattern.permute.xlu0 4
        %310 = vperm.xlu0 %309, %v263
        %v311 = vpop.permute.xlu0 %310
        %v313 = vmul.f32 %v311, %v307
        %v314 = vsel %vm308, %v307, %v313
        %315 = vst.msk [vmem:[%s252] sm:$0xf] %vm254, %v314
        %s316 = sand.u32 %s120, 1
        %s317 = scalar_lea.sflag [#allocation5], %s316
        %s318 = sand.u32 %s120, 1
        %s319 = smul.addr %s318, 4
        %s320 = scalar_lea.vmem [#allocation9], %s319
        // Predicated region
        $region45: #{tpu_custom_call.1} parent=31 // pred_check
          %p321 = pneg %p130
        $region46: #{tpu_custom_call.1} parent=31 // pred_check_branch
          %323 = sbr.rel (%p321) target = $region48
        $region47: #{tpu_custom_call.1} parent=31 // pred_region
          %s325 = ssub.s32 64, 64
          %326 = vsyncadd %s317, %s325
          %s327 = sadd.s32 %s26, %s25
          %s328 = smul.addr %s327, 64
          %s329 = scalar_lea.hbm %s3, %s328
          %s331 = sshll.u32 %s320, 4
          %s332 = int_to_ptr.vmem [resolvable:$true] %s331
          %334 = dma.vmem_to_hbm [thread:$0]  %s332, 64, %s329, %s317
        $region48: #{tpu_custom_call.1} parent=31 // pred_fallthru
          _
      $region32: #{tpu_custom_call.1} parent=5 // pred_fallthru
        _
      %p335 = scmp.le.s32.totalorder 2, %s16
      // Predicated region
      $region49: #{tpu_custom_call.1} parent=5 // pred_check
        %p336 = pneg %p335
      $region50: #{tpu_custom_call.1} parent=5 // pred_check_branch
        %338 = sbr.rel (%p336) target = $region52
      $region51: #{tpu_custom_call.1} parent=5 // pred_region
        %s339 = ssub.s32 %s16, 2
        // Predicated region
        $region53: #{tpu_custom_call.1} parent=51 // pred_check
          %p340 = pneg %p136
        $region54: #{tpu_custom_call.1} parent=51 // pred_check_branch
          %342 = sbr.rel (%p340) target = $region56
        $region55: #{tpu_custom_call.1} parent=51 // pred_region
          %s343 = sand.u32 %s121, 1
          %s344 = scalar_lea.sflag [#allocation5], %s343
          %s345 = sand.u32 %s121, 1
          %s346 = smul.addr %s345, 4
          %s347 = scalar_lea.vmem [#allocation9], %s346
          %348 = dma.done %s344, 64
        $region56: #{tpu_custom_call.1} parent=51 // pred_fallthru
          _
      $region52: #{tpu_custom_call.1} parent=5 // pred_fallthru
        _
    $region6: #{tpu_custom_call.1} parent=1 // loop_footer
      %s20 = sadd.s32 1, %s16
    $region7: #{tpu_custom_call.1} parent=1 // loop_footer_branch
      %15 = sbr.rel target = $region3
    $region8: #{tpu_custom_call.1} parent=1 // loop_exit
      _
    %349 = vsyncpa [#allocation4], 1
    %s350 = scalar_lea.sflag [#allocation4], 1
    %351 = vsyncpa %s350, 1
    %352 = vsyncpa [#allocation7], 1
    %353 = vsyncpa [#allocation5], 1
    %s354 = scalar_lea.sflag [#allocation5], 1
    %355 = vsyncpa %s354, 1

</llo_original>
